<compile_context>
chip_gen: v5e
topology: v5e:2x2
jax: 0.10.0
libtpu: 0.0.40
codegen_flags: <defaults>
</compile_context>

<pallas_src>
import functools

import jax
import jax.numpy as jnp
from jax import lax
from jax.experimental import pallas as pl
from jax.experimental.pallas import tpu as pltpu

LANES = 128


def _roundup(n, m):
    return -(-n // m) * m


def _dwconv_kernel(x_ref, w_ref, b_ref, o_ref, pad_ref,
                   *, K, P, H, W, Wo, TH, Hs, C):
    """Depthwise conv (stride 1) of one output-row stripe of one image.

    Grid: (B, T). Batch axis is 'parallel' (megacore-shardable); the stripe
    axis is 'arbitrary' (sequential) so the per-image padded scratch can be
    filled once at t == 0 and reused by every stripe of that image.

    x_ref  : (1, H, W, C)     full unpadded NHWC image (resident across t)
    w_ref  : (K*K, 1, C)      per-channel taps, leading index kh*K + kw
    b_ref  : (1, C)           per-channel bias
    o_ref  : (1, TH, Wo, C)   output row stripe
    pad_ref: (Hs, Wp, C)      VMEM scratch: zero-padded copy of the image
    """
    t = pl.program_id(1)
    Wp = W + 2 * P
    dt = x_ref.dtype

    # ---- once per image: build the zero-padded copy in VMEM ----------------
    @pl.when(t == 0)
    def _fill_padded():
        # (a) Zero the whole padded scratch with full-width, dense row-chunk
        #     stores (covers top/bottom pad rows, the left/right pad columns
        #     and any cdiv tail rows -- no narrow masked column stores).
        ZCH = 8
        zrow = jnp.zeros((ZCH, Wp, C), dt)
        for h0 in range(0, Hs, ZCH):
            rows = min(ZCH, Hs - h0)
            zchunk = zrow if rows == ZCH else jnp.zeros((rows, Wp, C), dt)
            pad_ref[pl.ds(h0, rows), :, :] = zchunk
        # (b) Copy the image into the interior (VMEM -> VMEM only; the image
        #     block is already resident, so no extra HBM traffic).
        # TODO(synk): for large images replace with one VMEM->VMEM
        # pltpu.make_async_copy to take this copy off the vector ld/st slots.
        CH = 8
        for h0 in range(0, H, CH):
            rows = min(CH, H - h0)
            pad_ref[pl.ds(h0 + P, rows), pl.ds(P, W), :] = \
                x_ref[0, pl.ds(h0, rows), :, :]

    # ---- per stripe: K*K per-channel multiply-accumulates (VPU only) -------
    r0 = pl.multiple_of(t * TH, TH)           # first output row of the stripe
    w_all = w_ref[...].astype(jnp.float32)    # (K*K, 1, C) taps, loaded once
    b_all = b_ref[...].astype(jnp.float32)    # (1, C)      bias, loaded once
    acc = jnp.zeros((TH, Wo, C), jnp.float32)
    for kh in range(K):
        for kw in range(K):
            win = pad_ref[pl.ds(r0 + kh, TH), pl.ds(kw, Wo), :]
            tap = w_all[kh * K + kw]                         # (1, C)
            acc = acc + win.astype(jnp.float32) * tap
    acc = acc + b_all                                        # (1, C) broadcast
    o_ref[0] = acc.astype(o_ref.dtype)


def _pick_row_tile(Ho, Wo, C, budget_vregs=48):
    """Output rows per stripe.

    Budgets the f32 accumulator (TH, Wo, C) plus one live (TH, Wo, C) window
    against ~budget_vregs vector registers (64 total) so the tap loop stays
    spill-free. Prefers a divisor of Ho (no partial tail stripe); falls back
    to cdiv + a partial last stripe when Ho has no useful divisor (e.g. prime
    Ho at late DaViT stages) instead of degrading to TH = 1.
    """
    lane_tiles = -(-C // 128)
    per_row = 2 * (-(-Wo // 8)) * lane_tiles
    cap = max(1, min(Ho, budget_vregs // max(1, per_row)))
    best_div = 1
    for th in range(cap, 0, -1):
        if Ho % th == 0:
            best_div = th
            break
    if 2 * best_div >= cap:
        return best_div
    return cap          # non-dividing; last stripe is a (masked) partial block


def depthwise_conv2d(x, size, weight, bias, *, kernel_size, padding, stride):
    """Pallas equivalent of DepthWiseConv2d.forward.

    x:      (B, N, C) with N == H*W
    size:   (H, W)
    weight: (C, 1, K, K)  -- torch nn.Conv2d(C, C, K, groups=C) weight layout
    bias:   (C,)
    returns (out (B, N', C), (H', W'))
    """
    B, N, C = x.shape
    H, W = size
    assert N == H * W
    K, S, P = kernel_size, stride, padding
    if S != 1:
        # TODO(synk): strided (stride > 1) depthwise conv is not implemented in
        # the Pallas path (DaViT ConvPosEnc uses stride 1); needs per-stripe
        # strided gathers or a different input blocking.
        raise NotImplementedError("Pallas depthwise_conv2d requires stride == 1")

    Hp, Wp = H + 2 * P, W + 2 * P
    Ho, Wo = Hp - K + 1, Wp - K + 1
    assert Ho >= 1 and Wo >= 1

    # (B, N, C) -> (B, H, W, C): identical elements to torch's
    # transpose(1, 2).view(B, C, H, W), just NHWC (channels on the lane axis).
    xi = x.reshape(B, H, W, C)
    # torch depthwise weight (C, 1, K, K) -> (K*K, 1, C); bias (C,) -> (1, C).
    w = jnp.transpose(weight.reshape(C, K * K), (1, 0))
    b = bias.reshape(1, C)

    # Lane-dense output stores: pad the channel axis to a multiple of 128.
    # TODO(synk): pack channel groups (or fold W) onto the lane axis instead of
    # zero-padding, to avoid the extra HBM copy when C % 128 != 0.
    Cp = _roundup(C, LANES)
    if Cp != C:
        pc = Cp - C
        xi = jnp.pad(xi, ((0, 0), (0, 0), (0, 0), (0, pc)))
        w = jnp.pad(w, ((0, 0), (0, pc)))
        b = jnp.pad(b, ((0, 0), (0, pc)))
    w3 = w.reshape(K * K, 1, Cp)

    TH = _pick_row_tile(Ho, Wo, Cp)       # output rows per stripe
    T = pl.cdiv(Ho, TH)
    # Scratch tall enough that the last (possibly partial) stripe can read its
    # full K-row window; extra rows are zero (treated as padding).
    Hs = max(Hp, T * TH + K - 1)

    itembytes = jnp.dtype(x.dtype).itemsize
    est_vmem = (2 * H * _roundup(W, 8) * Cp * itembytes        # image block (2 bufs)
                + Hs * _roundup(Wp, 8) * Cp * itembytes        # padded scratch
                + 2 * (K * K) * 8 * Cp * itembytes             # taps (2 bufs)
                + 2 * 8 * Cp * itembytes                       # bias (2 bufs)
                + 2 * TH * _roundup(Wo, 8) * Cp * itembytes)   # out stripe (2 bufs)
    vmem_limit = int(min(64 << 20, max(32 << 20, 3 * est_vmem // 2)))
    # TODO(synk): if est_vmem approaches v7x's 64 MiB (real DaViT maps with
    # large C), switch to halo-stripe input blocking + bf16 activations.

    kernel = functools.partial(_dwconv_kernel, K=K, P=P, H=H, W=W,
                               Wo=Wo, TH=TH, Hs=Hs, C=Cp)

    out = pl.pallas_call(
        kernel,
        out_shape=jax.ShapeDtypeStruct((B, Ho, Wo, Cp), x.dtype),
        grid=(B, T),
        in_specs=[
            # Full unpadded image per batch element; index_map ignores t, so
            # the block stays resident in VMEM across all stripes of an image
            # (one HBM read per image total).
            pl.BlockSpec((1, H, W, Cp), lambda bb, tt: (bb, 0, 0, 0)),
            pl.BlockSpec((K * K, 1, Cp), lambda bb, tt: (0, 0, 0)),
            pl.BlockSpec((1, Cp), lambda bb, tt: (0, 0)),
        ],
        out_specs=pl.BlockSpec((1, TH, Wo, Cp), lambda bb, tt: (bb, tt, 0, 0)),
        scratch_shapes=[pltpu.VMEM((Hs, Wp, Cp), x.dtype)],
        compiler_params=pltpu.CompilerParams(
            # Batch axis is megacore-shardable; the stripe axis must stay
            # sequential so the t == 0 scratch fill precedes the stripes.
            # TODO(synk): for B == 1 (or odd B) on v7x, make the stripe axis
            # shardable via per-stripe halo blocking.
            dimension_semantics=("parallel", "arbitrary"),
            vmem_limit_bytes=vmem_limit),
    )(xi, w3, b)

    if Cp != C:
        out = out[..., :C]
    return out.reshape(B, Ho * Wo, C), (Ho, Wo)


def _reference(x, size, weight, bias, *, kernel_size, padding, stride):
    """Pure-JAX reference (lax depthwise conv) for correctness checking."""
    B, N, C = x.shape
    H, W = size
    xi = x.reshape(B, H, W, C)
    # torch (C, 1, K, K) -> HWIO (K, K, 1, C) with feature_group_count=C
    w = jnp.transpose(weight, (2, 3, 1, 0))
    out = lax.conv_general_dilated(
        xi, w,
        window_strides=(stride, stride),
        padding=[(padding, padding), (padding, padding)],
        dimension_numbers=("NHWC", "HWIO", "NHWC"),
        feature_group_count=C,
        precision=lax.Precision.HIGHEST)
    out = out + bias.reshape(1, 1, 1, C)
    Ho, Wo = out.shape[1], out.shape[2]
    return out.reshape(B, Ho * Wo, C), (Ho, Wo)


if __name__ == "__main__":
    def _check(B, H, W, C, K, P, S, key):
        N = H * W
        kx, kwt, kb = jax.random.split(key, 3)
        x = jax.random.normal(kx, (B, N, C), dtype=jnp.float32)
        # torch nn.Conv2d(C, C, K, groups=C, bias=True) parameter shapes.
        weight = 0.1 * jax.random.normal(kwt, (C, 1, K, K), dtype=jnp.float32)
        bias = 0.1 * jax.random.normal(kb, (C,), dtype=jnp.float32)

        out, osz = depthwise_conv2d(x, (H, W), weight, bias,
                                    kernel_size=K, padding=P, stride=S)
        out = jax.block_until_ready(out)
        ref, rsz = _reference(x, (H, W), weight, bias,
                              kernel_size=K, padding=P, stride=S)
        assert out.shape == ref.shape, (out.shape, ref.shape)
        assert osz == rsz, (osz, rsz)
        err = float(jnp.max(jnp.abs(out - ref)))
        assert jnp.allclose(out, ref, atol=1e-5, rtol=1e-5), err

    key = jax.random.PRNGKey(0)
    k1, k2 = jax.random.split(key)
    # DaViT ConvPosEnc-style usage: kernel 3, padding 1, stride 1, lane-dense C.
    _check(B=2, H=16, W=16, C=128, K=3, P=1, S=1, key=k1)
    # Exercise the channel-padding path (DaViT width 96 is not a multiple of 128).
    _check(B=1, H=8, W=8, C=96, K=3, P=1, S=1, key=k2)
    print("KERNEL_OK")
</pallas_src>

<mosaic_0001>
module attributes {stable_mosaic.version = 11 : i64} {
  func.func @_dwconv_kernel(%arg0: i32, %arg1: i32, %arg2: memref<1x16x16x128xf32, #tpu.memory_space<vmem>>, %arg3: memref<9x1x128xf32, #tpu.memory_space<vmem>>, %arg4: memref<1x128xf32, #tpu.memory_space<vmem>>, %arg5: memref<1x8x16x128xf32, #tpu.memory_space<vmem>>, %arg6: memref<18x18x128xf32, #tpu.memory_space<vmem>>) attributes {dimension_semantics = [#tpu.dimension_semantics<parallel>, #tpu.dimension_semantics<arbitrary>], iteration_bounds = array<i64: 2, 2>, scalar_prefetch = 0 : i64, scratch_operands = 1 : i64, tpu.core_type = #tpu.core_type<tc>, window_params = [{transform_indices = @transform_0, window_bounds = array<i64: 1, 16, 16, 128>}, {pipeline_mode = #tpu.pipeline_mode<synchronous>, transform_indices = @transform_1, window_bounds = array<i64: 9, 1, 128>}, {pipeline_mode = #tpu.pipeline_mode<synchronous>, transform_indices = @transform_2, window_bounds = array<i64: 1, 128>}, {transform_indices = @transform_3, window_bounds = array<i64: 1, 8, 16, 128>}]} {
    %c0_i32 = arith.constant 0 : i32
    %0 = arith.cmpi eq, %arg1, %c0_i32 : i32
    %1 = arith.extui %0 : i1 to i32
    %c0_i32_0 = arith.constant 0 : i32
    %2 = arith.cmpi ne, %1, %c0_i32_0 : i32
    scf.if %2 {
      %cst_32 = arith.constant 0.000000e+00 : f32
      %95 = vector.broadcast %cst_32 : f32 to vector<8x18x128xf32>
      %c0_33 = arith.constant 0 : index
      %c0_34 = arith.constant 0 : index
      %c0_35 = arith.constant 0 : index
      %96 = vector.load %arg6[%c0_33, %c0_34, %c0_35] : memref<18x18x128xf32, #tpu.memory_space<vmem>>, vector<8x18x128xf32>
      tpu.vector_store %arg6[%c0_33, %c0_34, %c0_35], %95 {strides = array<i32>} : memref<18x18x128xf32, #tpu.memory_space<vmem>>, vector<8x18x128xf32>,
      %c8 = arith.constant 8 : index
      %c0_36 = arith.constant 0 : index
      %c0_37 = arith.constant 0 : index
      %97 = vector.load %arg6[%c8, %c0_36, %c0_37] : memref<18x18x128xf32, #tpu.memory_space<vmem>>, vector<8x18x128xf32>
      tpu.vector_store %arg6[%c8, %c0_36, %c0_37], %95 {strides = array<i32>} : memref<18x18x128xf32, #tpu.memory_space<vmem>>, vector<8x18x128xf32>,
      %cst_38 = arith.constant 0.000000e+00 : f32
      %98 = vector.broadcast %cst_38 : f32 to vector<2x18x128xf32>
      %c16 = arith.constant 16 : index
      %c0_39 = arith.constant 0 : index
      %c0_40 = arith.constant 0 : index
      %99 = vector.load %arg6[%c16, %c0_39, %c0_40] : memref<18x18x128xf32, #tpu.memory_space<vmem>>, vector<2x18x128xf32>
      tpu.vector_store %arg6[%c16, %c0_39, %c0_40], %98 {strides = array<i32>} : memref<18x18x128xf32, #tpu.memory_space<vmem>>, vector<2x18x128xf32>,
      %c0_41 = arith.constant 0 : index
      %c0_42 = arith.constant 0 : index
      %c0_43 = arith.constant 0 : index
      %c0_44 = arith.constant 0 : index
      %100 = vector.load %arg2[%c0_41, %c0_42, %c0_43, %c0_44] : memref<1x16x16x128xf32, #tpu.memory_space<vmem>>, vector<1x8x16x128xf32>
      %101 = vector.shape_cast %100 : vector<1x8x16x128xf32> to vector<8x16x128xf32>
      %c1_45 = arith.constant 1 : index
      %c1_46 = arith.constant 1 : index
      %c0_47 = arith.constant 0 : index
      %102 = vector.load %arg6[%c1_45, %c1_46, %c0_47] : memref<18x18x128xf32, #tpu.memory_space<vmem>>, vector<8x16x128xf32>
      tpu.vector_store %arg6[%c1_45, %c1_46, %c0_47], %101 {strides = array<i32>} : memref<18x18x128xf32, #tpu.memory_space<vmem>>, vector<8x16x128xf32>,
      %c0_48 = arith.constant 0 : index
      %c8_49 = arith.constant 8 : index
      %c0_50 = arith.constant 0 : index
      %c0_51 = arith.constant 0 : index
      %103 = vector.load %arg2[%c0_48, %c8_49, %c0_50, %c0_51] : memref<1x16x16x128xf32, #tpu.memory_space<vmem>>, vector<1x8x16x128xf32>
      %104 = vector.shape_cast %103 : vector<1x8x16x128xf32> to vector<8x16x128xf32>
      %c9 = arith.constant 9 : index
      %c1_52 = arith.constant 1 : index
      %c0_53 = arith.constant 0 : index
      %105 = vector.load %arg6[%c9, %c1_52, %c0_53] : memref<18x18x128xf32, #tpu.memory_space<vmem>>, vector<8x16x128xf32>
      tpu.vector_store %arg6[%c9, %c1_52, %c0_53], %104 {strides = array<i32>} : memref<18x18x128xf32, #tpu.memory_space<vmem>>, vector<8x16x128xf32>,
    } else {
    }
    %c8_i32 = arith.constant 8 : i32
    %3 = arith.muli %arg1, %c8_i32 : i32
    %4 = tpu.assume_multiple %3, 8 : i32
    %c0 = arith.constant 0 : index
    %c0_1 = arith.constant 0 : index
    %c0_2 = arith.constant 0 : index
    %5 = vector.load %arg3[%c0, %c0_1, %c0_2] : memref<9x1x128xf32, #tpu.memory_space<vmem>>, vector<9x1x128xf32>
    %c0_3 = arith.constant 0 : index
    %c0_4 = arith.constant 0 : index
    %6 = vector.load %arg4[%c0_3, %c0_4] : memref<1x128xf32, #tpu.memory_space<vmem>>, vector<1x128xf32>
    %cst = arith.constant 0.000000e+00 : f32
    %7 = vector.broadcast %cst : f32 to vector<8x16x128xf32>
    %c0_i32_5 = arith.constant 0 : i32
    %8 = arith.addi %4, %c0_i32_5 : i32
    %9 = arith.index_cast %8 : i32 to index
    %c0_6 = arith.constant 0 : index
    %c0_7 = arith.constant 0 : index
    %10 = vector.load %arg6[%9, %c0_6, %c0_7] : memref<18x18x128xf32, #tpu.memory_space<vmem>>, vector<8x16x128xf32>
    %11 = vector.extract_strided_slice %5 {offsets = [0, 0, 0], sizes = [1, 1, 128], strides = [1, 1, 1]} : vector<9x1x128xf32> to vector<1x1x128xf32>
    %12 = vector.shape_cast %11 : vector<1x1x128xf32> to vector<1x128xf32>
    %13 = vector.shape_cast %12 : vector<1x128xf32> to vector<1x1x128xf32>
    %14 = vector.broadcast %13 : vector<1x1x128xf32> to vector<8x16x128xf32>
    %15 = arith.mulf %10, %14 : vector<8x16x128xf32>
    %16 = arith.addf %7, %15 : vector<8x16x128xf32>
    %c0_i32_8 = arith.constant 0 : i32
    %17 = arith.addi %4, %c0_i32_8 : i32
    %18 = arith.index_cast %17 : i32 to index
    %c1 = arith.constant 1 : index
    %c0_9 = arith.constant 0 : index
    %19 = vector.load %arg6[%18, %c1, %c0_9] : memref<18x18x128xf32, #tpu.memory_space<vmem>>, vector<8x16x128xf32>
    %20 = vector.extract_strided_slice %5 {offsets = [1, 0, 0], sizes = [1, 1, 128], strides = [1, 1, 1]} : vector<9x1x128xf32> to vector<1x1x128xf32>
    %21 = vector.shape_cast %20 : vector<1x1x128xf32> to vector<1x128xf32>
    %22 = vector.shape_cast %21 : vector<1x128xf32> to vector<1x1x128xf32>
    %23 = vector.broadcast %22 : vector<1x1x128xf32> to vector<8x16x128xf32>
    %24 = arith.mulf %19, %23 : vector<8x16x128xf32>
    %25 = arith.addf %16, %24 : vector<8x16x128xf32>
    %c0_i32_10 = arith.constant 0 : i32
    %26 = arith.addi %4, %c0_i32_10 : i32
    %27 = arith.index_cast %26 : i32 to index
    %c2 = arith.constant 2 : index
    %c0_11 = arith.constant 0 : index
    %28 = vector.load %arg6[%27, %c2, %c0_11] : memref<18x18x128xf32, #tpu.memory_space<vmem>>, vector<8x16x128xf32>
    %29 = vector.extract_strided_slice %5 {offsets = [2, 0, 0], sizes = [1, 1, 128], strides = [1, 1, 1]} : vector<9x1x128xf32> to vector<1x1x128xf32>
    %30 = vector.shape_cast %29 : vector<1x1x128xf32> to vector<1x128xf32>
    %31 = vector.shape_cast %30 : vector<1x128xf32> to vector<1x1x128xf32>
    %32 = vector.broadcast %31 : vector<1x1x128xf32> to vector<8x16x128xf32>
    %33 = arith.mulf %28, %32 : vector<8x16x128xf32>
    %34 = arith.addf %25, %33 : vector<8x16x128xf32>
    %c1_i32 = arith.constant 1 : i32
    %35 = arith.addi %4, %c1_i32 : i32
    %36 = arith.index_cast %35 : i32 to index
    %c0_12 = arith.constant 0 : index
    %c0_13 = arith.constant 0 : index
    %37 = vector.load %arg6[%36, %c0_12, %c0_13] : memref<18x18x128xf32, #tpu.memory_space<vmem>>, vector<8x16x128xf32>
    %38 = vector.extract_strided_slice %5 {offsets = [3, 0, 0], sizes = [1, 1, 128], strides = [1, 1, 1]} : vector<9x1x128xf32> to vector<1x1x128xf32>
    %39 = vector.shape_cast %38 : vector<1x1x128xf32> to vector<1x128xf32>
    %40 = vector.shape_cast %39 : vector<1x128xf32> to vector<1x1x128xf32>
    %41 = vector.broadcast %40 : vector<1x1x128xf32> to vector<8x16x128xf32>
    %42 = arith.mulf %37, %41 : vector<8x16x128xf32>
    %43 = arith.addf %34, %42 : vector<8x16x128xf32>
    %c1_i32_14 = arith.constant 1 : i32
    %44 = arith.addi %4, %c1_i32_14 : i32
    %45 = arith.index_cast %44 : i32 to index
    %c1_15 = arith.constant 1 : index
    %c0_16 = arith.constant 0 : index
    %46 = vector.load %arg6[%45, %c1_15, %c0_16] : memref<18x18x128xf32, #tpu.memory_space<vmem>>, vector<8x16x128xf32>
    %47 = vector.extract_strided_slice %5 {offsets = [4, 0, 0], sizes = [1, 1, 128], strides = [1, 1, 1]} : vector<9x1x128xf32> to vector<1x1x128xf32>
    %48 = vector.shape_cast %47 : vector<1x1x128xf32> to vector<1x128xf32>
    %49 = vector.shape_cast %48 : vector<1x128xf32> to vector<1x1x128xf32>
    %50 = vector.broadcast %49 : vector<1x1x128xf32> to vector<8x16x128xf32>
    %51 = arith.mulf %46, %50 : vector<8x16x128xf32>
    %52 = arith.addf %43, %51 : vector<8x16x128xf32>
    %c1_i32_17 = arith.constant 1 : i32
    %53 = arith.addi %4, %c1_i32_17 : i32
    %54 = arith.index_cast %53 : i32 to index
    %c2_18 = arith.constant 2 : index
    %c0_19 = arith.constant 0 : index
    %55 = vector.load %arg6[%54, %c2_18, %c0_19] : memref<18x18x128xf32, #tpu.memory_space<vmem>>, vector<8x16x128xf32>
    %56 = vector.extract_strided_slice %5 {offsets = [5, 0, 0], sizes = [1, 1, 128], strides = [1, 1, 1]} : vector<9x1x128xf32> to vector<1x1x128xf32>
    %57 = vector.shape_cast %56 : vector<1x1x128xf32> to vector<1x128xf32>
    %58 = vector.shape_cast %57 : vector<1x128xf32> to vector<1x1x128xf32>
    %59 = vector.broadcast %58 : vector<1x1x128xf32> to vector<8x16x128xf32>
    %60 = arith.mulf %55, %59 : vector<8x16x128xf32>
    %61 = arith.addf %52, %60 : vector<8x16x128xf32>
    %c2_i32 = arith.constant 2 : i32
    %62 = arith.addi %4, %c2_i32 : i32
    %63 = arith.index_cast %62 : i32 to index
    %c0_20 = arith.constant 0 : index
    %c0_21 = arith.constant 0 : index
    %64 = vector.load %arg6[%63, %c0_20, %c0_21] : memref<18x18x128xf32, #tpu.memory_space<vmem>>, vector<8x16x128xf32>
    %65 = vector.extract_strided_slice %5 {offsets = [6, 0, 0], sizes = [1, 1, 128], strides = [1, 1, 1]} : vector<9x1x128xf32> to vector<1x1x128xf32>
    %66 = vector.shape_cast %65 : vector<1x1x128xf32> to vector<1x128xf32>
    %67 = vector.shape_cast %66 : vector<1x128xf32> to vector<1x1x128xf32>
    %68 = vector.broadcast %67 : vector<1x1x128xf32> to vector<8x16x128xf32>
    %69 = arith.mulf %64, %68 : vector<8x16x128xf32>
    %70 = arith.addf %61, %69 : vector<8x16x128xf32>
    %c2_i32_22 = arith.constant 2 : i32
    %71 = arith.addi %4, %c2_i32_22 : i32
    %72 = arith.index_cast %71 : i32 to index
    %c1_23 = arith.constant 1 : index
    %c0_24 = arith.constant 0 : index
    %73 = vector.load %arg6[%72, %c1_23, %c0_24] : memref<18x18x128xf32, #tpu.memory_space<vmem>>, vector<8x16x128xf32>
    %74 = vector.extract_strided_slice %5 {offsets = [7, 0, 0], sizes = [1, 1, 128], strides = [1, 1, 1]} : vector<9x1x128xf32> to vector<1x1x128xf32>
    %75 = vector.shape_cast %74 : vector<1x1x128xf32> to vector<1x128xf32>
    %76 = vector.shape_cast %75 : vector<1x128xf32> to vector<1x1x128xf32>
    %77 = vector.broadcast %76 : vector<1x1x128xf32> to vector<8x16x128xf32>
    %78 = arith.mulf %73, %77 : vector<8x16x128xf32>
    %79 = arith.addf %70, %78 : vector<8x16x128xf32>
    %c2_i32_25 = arith.constant 2 : i32
    %80 = arith.addi %4, %c2_i32_25 : i32
    %81 = arith.index_cast %80 : i32 to index
    %c2_26 = arith.constant 2 : index
    %c0_27 = arith.constant 0 : index
    %82 = vector.load %arg6[%81, %c2_26, %c0_27] : memref<18x18x128xf32, #tpu.memory_space<vmem>>, vector<8x16x128xf32>
    %83 = vector.extract_strided_slice %5 {offsets = [8, 0, 0], sizes = [1, 1, 128], strides = [1, 1, 1]} : vector<9x1x128xf32> to vector<1x1x128xf32>
    %84 = vector.shape_cast %83 : vector<1x1x128xf32> to vector<1x128xf32>
    %85 = vector.shape_cast %84 : vector<1x128xf32> to vector<1x1x128xf32>
    %86 = vector.broadcast %85 : vector<1x1x128xf32> to vector<8x16x128xf32>
    %87 = arith.mulf %82, %86 : vector<8x16x128xf32>
    %88 = arith.addf %79, %87 : vector<8x16x128xf32>
    %89 = vector.shape_cast %6 : vector<1x128xf32> to vector<1x1x128xf32>
    %90 = vector.broadcast %89 : vector<1x1x128xf32> to vector<8x16x128xf32>
    %91 = arith.addf %88, %90 : vector<8x16x128xf32>
    %c0_28 = arith.constant 0 : index
    %c0_29 = arith.constant 0 : index
    %c0_30 = arith.constant 0 : index
    %c0_31 = arith.constant 0 : index
    %92 = vector.load %arg5[%c0_28, %c0_29, %c0_30, %c0_31] : memref<1x8x16x128xf32, #tpu.memory_space<vmem>>, vector<1x8x16x128xf32>
    %93 = vector.shape_cast %92 : vector<1x8x16x128xf32> to vector<8x16x128xf32>
    %94 = vector.shape_cast %91 : vector<8x16x128xf32> to vector<1x8x16x128xf32>
    tpu.vector_store %arg5[%c0_28, %c0_29, %c0_30, %c0_31], %94 {strides = array<i32>} : memref<1x8x16x128xf32, #tpu.memory_space<vmem>>, vector<1x8x16x128xf32>,
    return
  }
  func.func @transform_0(%arg0: i32, %arg1: i32) -> (i32, i32, i32, i32) {
    %c0_i32 = arith.constant 0 : i32
    %c0_i32_0 = arith.constant 0 : i32
    %c0_i32_1 = arith.constant 0 : i32
    %c0_i32_2 = arith.constant 0 : i32
    return %arg0, %c0_i32, %c0_i32_0, %c0_i32_1 : i32, i32, i32, i32
  }
  func.func @transform_1(%arg0: i32, %arg1: i32) -> (i32, i32, i32) {
    %c0_i32 = arith.constant 0 : i32
    %c0_i32_0 = arith.constant 0 : i32
    %c0_i32_1 = arith.constant 0 : i32
    %c0_i32_2 = arith.constant 0 : i32
    return %c0_i32, %c0_i32_0, %c0_i32_1 : i32, i32, i32
  }
  func.func @transform_2(%arg0: i32, %arg1: i32) -> (i32, i32) {
    %c0_i32 = arith.constant 0 : i32
    %c0_i32_0 = arith.constant 0 : i32
    %c0_i32_1 = arith.constant 0 : i32
    return %c0_i32, %c0_i32_0 : i32, i32
  }
  func.func @transform_3(%arg0: i32, %arg1: i32) -> (i32, i32, i32, i32) {
    %c0_i32 = arith.constant 0 : i32
    %c0_i32_0 = arith.constant 0 : i32
    %c0_i32_1 = arith.constant 0 : i32
    return %arg0, %arg1, %c0_i32, %c0_i32_0 : i32, i32, i32, i32
  }
}

</mosaic_0001>

<llo_original>
// kernel: tpu_custom_call.1
$region0: #{tpu_custom_call.1}
  #allocation0 [shape = 'u32[]', space=smem, size = 0x4, offset = 0x4, fixed_abs, tag = 'smem constant byte address 0x4 - core index']
  #allocation1 [shape = 'u32[72,128]{1,0:T(1,128)}', space=vmem, size = 0x9000, scoped, tag = 'internal scratch']
  #allocation2 [shape = 'f32[18,18,128]{2,1,0:T(8,128)}', space=vmem, size = 0x36000, scoped, tag = 'scratch operand']
  %s0 = inlined_call_operand.hbm [shape: f32[2,16,16,128], index: 0, kind: input, shape index: {}]
  %s1 = inlined_call_operand.hbm [shape: f32[9,1,128], index: 1, kind: input, shape index: {}]
  %s2 = inlined_call_operand.vmem [shape: f32[1,128], index: 2, kind: input, shape index: {}]
  %s3 = inlined_call_operand.hbm [shape: f32[2,16,16,128], index: 3, kind: output, shape index: {}]
  %s4 = sld [smem:[#allocation0]]
  $region57: #{tpu_custom_call.1} parent=0
    _
  %s6 = ssub.s32 1, %s4
  %s7 = scalar_select 0, %s6, %s4
  $region1: #{tpu_custom_call.1} parent=0
    #allocation3 [shape = 'u8[262144]{0}', space=vmem, size = 0x40000, scoped, tag = 'input window, operand 0']
    #allocation4 [shape = 's32[2]{0}', space=sflag, size = 0x8, scoped, tag = 'scoped memory for tpu_custom_call.1']
    #allocation5 [shape = 's32[2]{0}', space=sflag, size = 0x8, scoped, tag = 'scoped memory for tpu_custom_call.1']
    #allocation6 [shape = 'u8[4608]{0}', space=vmem, size = 0x1400, scoped, tag = 'input window, operand 1, single buffered']
    #allocation7 [shape = 's32[1]{0}', space=sflag, size = 0x4, scoped, tag = 'scoped memory for tpu_custom_call.1']
    #allocation8 [shape = 'u8[131072]{0}', space=vmem, size = 0x20000, scoped, tag = 'output window, operand 0']
    %8 = vsyncpa [#allocation4], 0
    %s9 = scalar_lea.sflag [#allocation4], 1
    %10 = vsyncpa %s9, 0
    %11 = vsyncpa [#allocation7], 0
    %12 = vsyncpa [#allocation5], 0
    %s13 = scalar_lea.sflag [#allocation5], 1
    %14 = vsyncpa %s13, 0
    loop: start=0, step=1, limit=6
    $region2: #{tpu_custom_call.1} parent=1 // loop_pre_header
      _
    $region3: #{tpu_custom_call.1} parent=1 // loop_header
      %s16 = sphi 0, %s20
      %p17 = scmp.ge.s32.totalorder %s16, 6
      %s23 = sphi 0, %s35
      %s24 = sphi 0, %s31
      %s25 = sphi 0, %s23
      %s26 = sphi 0, %s24
      %s27 = sphi 0, %s25
      %s28 = sphi 0, %s26
      %s38 = sphi 0, %s40
      %s41 = sphi 0, %s38
      %s42 = sphi 0, %s41
      %s58 = sphi 0, %s42
      %s62 = sphi 0, %s62
      %s64 = sphi 0, %s62
      %s65 = sphi 0, %s64
      %s79 = sphi 0, %s65
      %s83 = sphi 0, %s83
      %s85 = sphi 0, %s83
      %s86 = sphi 0, %s85
      %s100 = sphi 0, %s86
      %s108 = sphi 0, %s110
      %s111 = sphi 0, %s108
      %s112 = sphi 0, %s111
      %s128 = sphi 0, %s112
    $region4: #{tpu_custom_call.1} parent=1 // loop_header_branch
      %19 = sbr.rel (%p17) target = $region8
    $region5: #{tpu_custom_call.1} parent=1 // loop_body
      %s21 = ssub.s32 %s16, 1
      %s22 = ssub.s32 %s16, 2
      %s29 = sadd.s32 1, %s24
      %p30 = scmp.ge.s32.totalorder %s29, 2
      %s31 = scalar_select %p30, 0, %s29
      %s32 = sadd.s32 1, %s23
      %s33 = scalar_select %p30, %s32, %s23
      %p34 = scmp.ge.s32.totalorder %s33, 2
      %s35 = scalar_select %p34, 0, %s33
      %s36 = ssub.s32 %s23, %s35
      %p37 = scmp.eq.s32.totalorder %s36, 0
      %s39 = sadd.s32 %s38, 1
      %s40 = scalar_select %p37, %s38, %s39
      %p43 = pneg %p37
      %p44 = scmp.eq.s32.totalorder %s16, 3
      %p45 = por %p43, %p44
      %p46 = scmp.ne.s32.totalorder %s38, %s41
      %p47 = scmp.eq.s32.totalorder %s16, 0
      %p48 = por %p46, %p47
      %p49 = scmp.ne.s32.totalorder %s38, %s41
      %p50 = scmp.eq.s32.totalorder %s21, 3
      %p51 = por %p49, %p50
      %p52 = scmp.ne.s32.totalorder %s41, %s42
      %p53 = scmp.eq.s32.totalorder %s21, 0
      %p54 = por %p52, %p53
      %p55 = scmp.ne.s32.totalorder %s41, %s42
      %p56 = scmp.eq.s32.totalorder %s22, 3
      %p57 = por %p55, %p56
      %p59 = scmp.ne.s32.totalorder %s42, %s58
      %p60 = scmp.eq.s32.totalorder %s22, 0
      %p61 = por %p59, %p60
      %s63 = sadd.s32 %s62, 1
      %p66 = scmp.eq.s32.totalorder %s16, 3
      %p67 = scmp.ne.s32.totalorder %s62, %s64
      %p68 = scmp.eq.s32.totalorder %s16, 0
      %p69 = por %p67, %p68
      %p70 = scmp.ne.s32.totalorder %s62, %s64
      %p71 = scmp.eq.s32.totalorder %s21, 3
      %p72 = por %p70, %p71
      %p73 = scmp.ne.s32.totalorder %s64, %s65
      %p74 = scmp.eq.s32.totalorder %s21, 0
      %p75 = por %p73, %p74
      %p76 = scmp.ne.s32.totalorder %s64, %s65
      %p77 = scmp.eq.s32.totalorder %s22, 3
      %p78 = por %p76, %p77
      %p80 = scmp.ne.s32.totalorder %s65, %s79
      %p81 = scmp.eq.s32.totalorder %s22, 0
      %p82 = por %p80, %p81
      %s84 = sadd.s32 %s83, 1
      %p87 = scmp.eq.s32.totalorder %s16, 3
      %p88 = scmp.ne.s32.totalorder %s83, %s85
      %p89 = scmp.eq.s32.totalorder %s16, 0
      %p90 = por %p88, %p89
      %p91 = scmp.ne.s32.totalorder %s83, %s85
      %p92 = scmp.eq.s32.totalorder %s21, 3
      %p93 = por %p91, %p92
      %p94 = scmp.ne.s32.totalorder %s85, %s86
      %p95 = scmp.eq.s32.totalorder %s21, 0
      %p96 = por %p94, %p95
      %p97 = scmp.ne.s32.totalorder %s85, %s86
      %p98 = scmp.eq.s32.totalorder %s22, 3
      %p99 = por %p97, %p98
      %p101 = scmp.ne.s32.totalorder %s86, %s100
      %p102 = scmp.eq.s32.totalorder %s22, 0
      %p103 = por %p101, %p102
      %s104 = ssub.s32 %s23, %s35
      %s105 = ssub.s32 %s24, %s31
      %s106 = sor.u32 %s104, %s105
      %p107 = scmp.eq.s32.totalorder %s106, 0
      %s109 = sadd.s32 %s108, 1
      %s110 = scalar_select %p107, %s108, %s109
      %p113 = pneg %p107
      %p114 = scmp.eq.s32.totalorder %s16, 3
      %p115 = por %p113, %p114
      %p116 = scmp.ne.s32.totalorder %s108, %s111
      %p117 = scmp.eq.s32.totalorder %s16, 0
      %p118 = por %p116, %p117
      %p119 = scmp.ne.s32.totalorder %s108, %s111
      %p120 = scmp.eq.s32.totalorder %s21, 3
      %p121 = por %p119, %p120
      %p122 = scmp.ne.s32.totalorder %s111, %s112
      %p123 = scmp.eq.s32.totalorder %s21, 0
      %p124 = por %p122, %p123
      %p125 = scmp.ne.s32.totalorder %s111, %s112
      %p126 = scmp.eq.s32.totalorder %s22, 3
      %p127 = por %p125, %p126
      %p129 = scmp.ne.s32.totalorder %s112, %s128
      %p130 = scmp.eq.s32.totalorder %s22, 0
      %p131 = por %p129, %p130
      %p132 = scmp.le.s32.totalorder 1, %s16
      %p133 = scmp.lt.s32.totalorder %s16, 5
      %p134 = pnand %p132, %p133
      %p135 = pneg %p134
      // Predicated region
      $region9: #{tpu_custom_call.1} parent=5 // pred_check
        _
      $region10: #{tpu_custom_call.1} parent=5 // pred_check_branch
        %137 = sbr.rel (%p134) target = $region12
      $region11: #{tpu_custom_call.1} parent=5 // pred_region
        %s138 = ssub.s32 %s16, 1
        // Predicated region
        $region13: #{tpu_custom_call.1} parent=11 // pred_check
          %p139 = pneg %p75
        $region14: #{tpu_custom_call.1} parent=11 // pred_check_branch
          %141 = sbr.rel (%p139) target = $region16
        $region15: #{tpu_custom_call.1} parent=11 // pred_region
          %143 = vsyncadd [#allocation7], 0
          %s144 = sshll.u32 %s1, 4
          %s145 = int_to_ptr.hbm [resolvable:$true] %s144
          %s146 = sshll.u32 [#allocation6], 4
          %s147 = int_to_ptr.vmem [resolvable:$true] %s146
          %152 = dma.hbm_to_vmem [thread:$0]  %s145, 144, %s147, [#allocation7], 16, 16, 1
        $region16: #{tpu_custom_call.1} parent=11 // pred_fallthru
          _
        // Predicated region
        $region17: #{tpu_custom_call.1} parent=11 // pred_check
          %p153 = pneg %p96
        $region18: #{tpu_custom_call.1} parent=11 // pred_check_branch
          %155 = sbr.rel (%p153) target = $region20
        $region19: #{tpu_custom_call.1} parent=11 // pred_region
          _
        $region20: #{tpu_custom_call.1} parent=11 // pred_fallthru
          _
      $region12: #{tpu_custom_call.1} parent=5 // pred_fallthru
        _
      %p156 = scmp.lt.s32.totalorder %s16, 4
      // Predicated region
      $region21: #{tpu_custom_call.1} parent=5 // pred_check
        %p157 = pneg %p156
      $region22: #{tpu_custom_call.1} parent=5 // pred_check_branch
        %159 = sbr.rel (%p157) target = $region24
      $region23: #{tpu_custom_call.1} parent=5 // pred_region
        // Predicated region
        $region25: #{tpu_custom_call.1} parent=23 // pred_check
          %p160 = pneg %p48
        $region26: #{tpu_custom_call.1} parent=23 // pred_check_branch
          %162 = sbr.rel (%p160) target = $region28
        $region27: #{tpu_custom_call.1} parent=23 // pred_region
          %s163 = sand.u32 %s38, 1
          %s164 = scalar_lea.sflag [#allocation4], %s163
          %s165 = sand.u32 %s38, 1
          %s166 = smul.addr %s165, 256
          %s167 = scalar_lea.vmem [#allocation3], %s166
          %169 = vsyncadd %s164, 0
          %s170 = smul.addr %s23, 32
          %s171 = smul.addr %s170, 8
          %s172 = scalar_lea.hbm %s0, %s171
          %s173 = sshll.u32 %s172, 4
          %s174 = int_to_ptr.hbm [resolvable:$true] %s173
          %s175 = sshll.u32 %s167, 4
          %s176 = int_to_ptr.vmem [resolvable:$true] %s175
          %181 = dma.hbm_to_vmem [thread:$0]  %s174, 4096, %s176, %s164, 128, 128, 8
        $region28: #{tpu_custom_call.1} parent=23 // pred_fallthru
          _
      $region24: #{tpu_custom_call.1} parent=5 // pred_fallthru
        _
      %p182 = scmp.le.s32.totalorder 1, %s16
      %p183 = scmp.lt.s32.totalorder %s16, 5
      %p184 = pnand %p182, %p183
      %p185 = pneg %p184
      // Predicated region
      $region29: #{tpu_custom_call.1} parent=5 // pred_check
        _
      $region30: #{tpu_custom_call.1} parent=5 // pred_check_branch
        %187 = sbr.rel (%p184) target = $region32
      $region31: #{tpu_custom_call.1} parent=5 // pred_region
        %s188 = ssub.s32 %s16, 1
        %s189 = sand.u32 %s41, 1
        %s190 = scalar_lea.sflag [#allocation4], %s189
        %s191 = sand.u32 %s41, 1
        %s192 = smul.addr %s191, 256
        %s193 = scalar_lea.vmem [#allocation3], %s192
        // Predicated region
        $region33: #{tpu_custom_call.1} parent=31 // pred_check
          %p194 = pneg %p54
        $region34: #{tpu_custom_call.1} parent=31 // pred_check_branch
          %196 = sbr.rel (%p194) target = $region36
        $region35: #{tpu_custom_call.1} parent=31 // pred_region
          %198 = dma.done %s190, 4096
        $region36: #{tpu_custom_call.1} parent=31 // pred_fallthru
          _
        // Predicated region
        $region37: #{tpu_custom_call.1} parent=31 // pred_check
          %p199 = pneg %p75
        $region38: #{tpu_custom_call.1} parent=31 // pred_check_branch
          %201 = sbr.rel (%p199) target = $region40
        $region39: #{tpu_custom_call.1} parent=31 // pred_region
          %203 = dma.done [#allocation7], 144
        $region40: #{tpu_custom_call.1} parent=31 // pred_fallthru
          _
        %s204 = sand.u32 %s41, 1
        %s205 = scalar_lea.sflag [#allocation4], %s204
        %s206 = sand.u32 %s41, 1
        %s207 = smul.addr %s206, 256
        %s208 = scalar_lea.vmem [#allocation3], %s207
        %p209 = pneg %p54
        %p210 = pneg %p51
        %p211 = pneg %p75
        %p212 = pneg %p72
        %p213 = pneg %p96
        %p214 = pneg %p93
        %p215 = pneg %p124
        %p216 = pneg %p121
        %s217 = sand.u32 %s111, 1
        %s218 = scalar_lea.sflag [#allocation5], %s217
        %s219 = sand.u32 %s111, 1
        %s220 = smul.addr %s219, 128
        %s221 = scalar_lea.vmem [#allocation8], %s220
        %s222 = smul.u32 8, %s26
        %p223 = scmp.eq.s32.totalorder %s26, 0
        // Predicated region
        $region41: #{tpu_custom_call.1} parent=31 // pred_check
          %p224 = pneg %p223
        $region42: #{tpu_custom_call.1} parent=31 // pred_check_branch
          %226 = sbr.rel (%p224) target = $region44
        $region43: #{tpu_custom_call.1} parent=31 // pred_region
          %227 = vst [vmem:[#allocation2] sm:$0xff] 0.0
          %228 = vst [vmem:[#allocation2 + $0x8] sm:$0xff] 0.0
          %229 = vst [vmem:[#allocation2 + $0x10] sm:$0x3] 0.0
          %230 = vst [vmem:[#allocation2 + $0x18] sm:$0xff] 0.0
          %231 = vst [vmem:[#allocation2 + $0x20] sm:$0xff] 0.0
          %232 = vst [vmem:[#allocation2 + $0x28] sm:$0x3] 0.0
          %233 = vst [vmem:[#allocation2 + $0x30] sm:$0xff] 0.0
          %234 = vst [vmem:[#allocation2 + $0x38] sm:$0xff] 0.0
          %235 = vst [vmem:[#allocation2 + $0x40] sm:$0x3] 0.0
          %236 = vst [vmem:[#allocation2 + $0x48] sm:$0xff] 0.0
          %237 = vst [vmem:[#allocation2 + $0x50] sm:$0xff] 0.0
          %238 = vst [vmem:[#allocation2 + $0x58] sm:$0x3] 0.0
          %239 = vst [vmem:[#allocation2 + $0x60] sm:$0xff] 0.0
          %240 = vst [vmem:[#allocation2 + $0x68] sm:$0xff] 0.0
          %241 = vst [vmem:[#allocation2 + $0x70] sm:$0x3] 0.0
          %242 = vst [vmem:[#allocation2 + $0x78] sm:$0xff] 0.0
          %243 = vst [vmem:[#allocation2 + $0x80] sm:$0xff] 0.0
          %244 = vst [vmem:[#allocation2 + $0x88] sm:$0x3] 0.0
          %245 = vst [vmem:[#allocation2 + $0x90] sm:$0xff] 0.0
          %246 = vst [vmem:[#allocation2 + $0x98] sm:$0xff] 0.0
          %247 = vst [vmem:[#allocation2 + $0xa0] sm:$0x3] 0.0
          %248 = vst [vmem:[#allocation2 + $0xa8] sm:$0xff] 0.0
          %249 = vst [vmem:[#allocation2 + $0xb0] sm:$0xff] 0.0
          %250 = vst [vmem:[#allocation2 + $0xb8] sm:$0x3] 0.0
          %s251 = scalar_lea.vmem [#allocation2], 192
          %252 = vst [vmem:[%s251] sm:$0xff] 0.0
          %253 = vst [vmem:[%s251 + $0x8] sm:$0xff] 0.0
          %254 = vst [vmem:[%s251 + $0x10] sm:$0x3] 0.0
          %255 = vst [vmem:[%s251 + $0x18] sm:$0xff] 0.0
          %256 = vst [vmem:[%s251 + $0x20] sm:$0xff] 0.0
          %257 = vst [vmem:[%s251 + $0x28] sm:$0x3] 0.0
          %258 = vst [vmem:[%s251 + $0x30] sm:$0xff] 0.0
          %259 = vst [vmem:[%s251 + $0x38] sm:$0xff] 0.0
          %260 = vst [vmem:[%s251 + $0x40] sm:$0x3] 0.0
          %261 = vst [vmem:[%s251 + $0x48] sm:$0xff] 0.0
          %262 = vst [vmem:[%s251 + $0x50] sm:$0xff] 0.0
          %263 = vst [vmem:[%s251 + $0x58] sm:$0x3] 0.0
          %264 = vst [vmem:[%s251 + $0x60] sm:$0xff] 0.0
          %265 = vst [vmem:[%s251 + $0x68] sm:$0xff] 0.0
          %266 = vst [vmem:[%s251 + $0x70] sm:$0x3] 0.0
          %267 = vst [vmem:[%s251 + $0x78] sm:$0xff] 0.0
          %268 = vst [vmem:[%s251 + $0x80] sm:$0xff] 0.0
          %269 = vst [vmem:[%s251 + $0x88] sm:$0x3] 0.0
          %270 = vst [vmem:[%s251 + $0x90] sm:$0xff] 0.0
          %271 = vst [vmem:[%s251 + $0x98] sm:$0xff] 0.0
          %272 = vst [vmem:[%s251 + $0xa0] sm:$0x3] 0.0
          %273 = vst [vmem:[%s251 + $0xa8] sm:$0xff] 0.0
          %274 = vst [vmem:[%s251 + $0xb0] sm:$0xff] 0.0
          %275 = vst [vmem:[%s251 + $0xb8] sm:$0x3] 0.0
          %s276 = scalar_lea.vmem [#allocation2], 384
          %277 = vst [vmem:[%s276] sm:$0xff] 0.0
          %278 = vst [vmem:[%s276 + $0x8] sm:$0xff] 0.0
          %279 = vst [vmem:[%s276 + $0x10] sm:$0x3] 0.0
          %280 = vst [vmem:[%s276 + $0x18] sm:$0xff] 0.0
          %281 = vst [vmem:[%s276 + $0x20] sm:$0xff] 0.0
          %282 = vst [vmem:[%s276 + $0x28] sm:$0x3] 0.0
          %v283 = vld [vmem:[%s193] sm:$0xff]
          %v284 = vld [vmem:[%s193 + $0x8] sm:$0xff]
          %v285 = vld [vmem:[%s193 + $0x10] sm:$0xff]
          %v286 = vld [vmem:[%s193 + $0x18] sm:$0xff]
          %v287 = vld [vmem:[%s193 + $0x20] sm:$0xff]
          %v288 = vld [vmem:[%s193 + $0x28] sm:$0xff]
          %v289 = vld [vmem:[%s193 + $0x30] sm:$0xff]
          %v290 = vld [vmem:[%s193 + $0x38] sm:$0xff]
          %v291 = vld [vmem:[%s193 + $0x40] sm:$0xff]
          %v292 = vld [vmem:[%s193 + $0x48] sm:$0xff]
          %v293 = vld [vmem:[%s193 + $0x50] sm:$0xff]
          %v294 = vld [vmem:[%s193 + $0x58] sm:$0xff]
          %v295 = vld [vmem:[%s193 + $0x60] sm:$0xff]
          %v296 = vld [vmem:[%s193 + $0x68] sm:$0xff]
          %v297 = vld [vmem:[%s193 + $0x70] sm:$0xff]
          %v298 = vld [vmem:[%s193 + $0x78] sm:$0xff]
          %s299 = scalar_lea.vmem [#allocation2], 24
          %300 = vst [vmem:[%s299 + $0x1] sm:$0xff] %v283
          %301 = vst [vmem:[%s299 + $0x9] sm:$0xff] %v284
          %302 = vst [vmem:[%s299 + $0x19] sm:$0xff] %v285
          %303 = vst [vmem:[%s299 + $0x21] sm:$0xff] %v286
          %304 = vst [vmem:[%s299 + $0x31] sm:$0xff] %v287
          %305 = vst [vmem:[%s299 + $0x39] sm:$0xff] %v288
          %306 = vst [vmem:[%s299 + $0x49] sm:$0xff] %v289
          %307 = vst [vmem:[%s299 + $0x51] sm:$0xff] %v290
          %308 = vst [vmem:[%s299 + $0x61] sm:$0xff] %v291
          %309 = vst [vmem:[%s299 + $0x69] sm:$0xff] %v292
          %310 = vst [vmem:[%s299 + $0x79] sm:$0xff] %v293
          %311 = vst [vmem:[%s299 + $0x81] sm:$0xff] %v294
          %312 = vst [vmem:[%s299 + $0x91] sm:$0xff] %v295
          %313 = vst [vmem:[%s299 + $0x99] sm:$0xff] %v296
          %314 = vst [vmem:[%s299 + $0xa9] sm:$0xff] %v297
          %315 = vst [vmem:[%s299 + $0xb1] sm:$0xff] %v298
          %s316 = scalar_lea.vmem %s193, 128 [#allocation3]
          %v317 = vld [vmem:[%s316] sm:$0xff]
          %v318 = vld [vmem:[%s316 + $0x8] sm:$0xff]
          %v319 = vld [vmem:[%s316 + $0x10] sm:$0xff]
          %v320 = vld [vmem:[%s316 + $0x18] sm:$0xff]
          %v321 = vld [vmem:[%s316 + $0x20] sm:$0xff]
          %v322 = vld [vmem:[%s316 + $0x28] sm:$0xff]
          %v323 = vld [vmem:[%s316 + $0x30] sm:$0xff]
          %v324 = vld [vmem:[%s316 + $0x38] sm:$0xff]
          %v325 = vld [vmem:[%s316 + $0x40] sm:$0xff]
          %v326 = vld [vmem:[%s316 + $0x48] sm:$0xff]
          %v327 = vld [vmem:[%s316 + $0x50] sm:$0xff]
          %v328 = vld [vmem:[%s316 + $0x58] sm:$0xff]
          %v329 = vld [vmem:[%s316 + $0x60] sm:$0xff]
          %v330 = vld [vmem:[%s316 + $0x68] sm:$0xff]
          %v331 = vld [vmem:[%s316 + $0x70] sm:$0xff]
          %v332 = vld [vmem:[%s316 + $0x78] sm:$0xff]
          %s333 = scalar_lea.vmem [#allocation2], 216
          %334 = vst [vmem:[%s333 + $0x1] sm:$0xff] %v317
          %335 = vst [vmem:[%s333 + $0x9] sm:$0xff] %v318
          %336 = vst [vmem:[%s333 + $0x19] sm:$0xff] %v319
          %337 = vst [vmem:[%s333 + $0x21] sm:$0xff] %v320
          %338 = vst [vmem:[%s333 + $0x31] sm:$0xff] %v321
          %339 = vst [vmem:[%s333 + $0x39] sm:$0xff] %v322
          %340 = vst [vmem:[%s333 + $0x49] sm:$0xff] %v323
          %341 = vst [vmem:[%s333 + $0x51] sm:$0xff] %v324
          %342 = vst [vmem:[%s333 + $0x61] sm:$0xff] %v325
          %343 = vst [vmem:[%s333 + $0x69] sm:$0xff] %v326
          %344 = vst [vmem:[%s333 + $0x79] sm:$0xff] %v327
          %345 = vst [vmem:[%s333 + $0x81] sm:$0xff] %v328
          %346 = vst [vmem:[%s333 + $0x91] sm:$0xff] %v329
          %347 = vst [vmem:[%s333 + $0x99] sm:$0xff] %v330
          %348 = vst [vmem:[%s333 + $0xa9] sm:$0xff] %v331
          %349 = vst [vmem:[%s333 + $0xb1] sm:$0xff] %v332
        $region44: #{tpu_custom_call.1} parent=31 // pred_fallthru
          _
        %s350 = smul.u32 %s26, 8
        %v351 = vld [vmem:[#allocation6] sm:$0x1]
        %v352 = vld [vmem:[#allocation6 + $0x1] sm:$0x1]
        %v353 = vld [vmem:[#allocation6 + $0x2] sm:$0x1]
        %v354 = vld [vmem:[#allocation6 + $0x3] sm:$0x1]
        %v355 = vld [vmem:[#allocation6 + $0x4] sm:$0x1]
        %v356 = vld [vmem:[#allocation6 + $0x5] sm:$0x1]
        %v357 = vld [vmem:[#allocation6 + $0x6] sm:$0x1]
        %v358 = vld [vmem:[#allocation6 + $0x7] sm:$0x1]
        %v359 = vld [vmem:[#allocation6 + $0x8] sm:$0x1]
        %v360 = vld [vmem:[%s2] sm:$0x1]
        %s361 = smul.u32 %s350, 24
        %s362 = scalar_lea.vmem [#allocation2], %s361
        %v363 = vld [vmem:[%s362] sm:$0xff]
        %v364 = vld [vmem:[%s362 + $0x8] sm:$0xff]
        %v365 = vld [vmem:[%s362 + $0x18] sm:$0xff]
        %v366 = vld [vmem:[%s362 + $0x20] sm:$0xff]
        %v367 = vld [vmem:[%s362 + $0x30] sm:$0xff]
        %v368 = vld [vmem:[%s362 + $0x38] sm:$0xff]
        %v369 = vld [vmem:[%s362 + $0x48] sm:$0xff]
        %v370 = vld [vmem:[%s362 + $0x50] sm:$0xff]
        %v371 = vld [vmem:[%s362 + $0x60] sm:$0xff]
        %v372 = vld [vmem:[%s362 + $0x68] sm:$0xff]
        %v373 = vld [vmem:[%s362 + $0x78] sm:$0xff]
        %v374 = vld [vmem:[%s362 + $0x80] sm:$0xff]
        %v375 = vld [vmem:[%s362 + $0x90] sm:$0xff]
        %v376 = vld [vmem:[%s362 + $0x98] sm:$0xff]
        %v377 = vld [vmem:[%s362 + $0xa8] sm:$0xff]
        %v378 = vld [vmem:[%s362 + $0xb0] sm:$0xff]
        %v380 = vperm.slane %v351, 0
        %v382 = vmul.f32 %v363, %v380
        %v383 = vmul.f32 %v364, %v380
        %v384 = vmul.f32 %v365, %v380
        %v385 = vmul.f32 %v366, %v380
        %v386 = vmul.f32 %v367, %v380
        %v387 = vmul.f32 %v368, %v380
        %v388 = vmul.f32 %v369, %v380
        %v389 = vmul.f32 %v370, %v380
        %v390 = vmul.f32 %v371, %v380
        %v391 = vmul.f32 %v372, %v380
        %v392 = vmul.f32 %v373, %v380
        %v393 = vmul.f32 %v374, %v380
        %v394 = vmul.f32 %v375, %v380
        %v395 = vmul.f32 %v376, %v380
        %v396 = vmul.f32 %v377, %v380
        %v397 = vmul.f32 %v378, %v380
        %v398 = vadd.f32 %v382, 0.0
        %v399 = vadd.f32 %v383, 0.0
        %v400 = vadd.f32 %v384, 0.0
        %v401 = vadd.f32 %v385, 0.0
        %v402 = vadd.f32 %v386, 0.0
        %v403 = vadd.f32 %v387, 0.0
        %v404 = vadd.f32 %v388, 0.0
        %v405 = vadd.f32 %v389, 0.0
        %v406 = vadd.f32 %v390, 0.0
        %v407 = vadd.f32 %v391, 0.0
        %v408 = vadd.f32 %v392, 0.0
        %v409 = vadd.f32 %v393, 0.0
        %v410 = vadd.f32 %v394, 0.0
        %v411 = vadd.f32 %v395, 0.0
        %v412 = vadd.f32 %v396, 0.0
        %v413 = vadd.f32 %v397, 0.0
        %v414 = vld [vmem:[%s362 + $0x1] sm:$0xff]
        %v415 = vld [vmem:[%s362 + $0x9] sm:$0xff]
        %v416 = vld [vmem:[%s362 + $0x19] sm:$0xff]
        %v417 = vld [vmem:[%s362 + $0x21] sm:$0xff]
        %v418 = vld [vmem:[%s362 + $0x31] sm:$0xff]
        %v419 = vld [vmem:[%s362 + $0x39] sm:$0xff]
        %v420 = vld [vmem:[%s362 + $0x49] sm:$0xff]
        %v421 = vld [vmem:[%s362 + $0x51] sm:$0xff]
        %v422 = vld [vmem:[%s362 + $0x61] sm:$0xff]
        %v423 = vld [vmem:[%s362 + $0x69] sm:$0xff]
        %v424 = vld [vmem:[%s362 + $0x79] sm:$0xff]
        %v425 = vld [vmem:[%s362 + $0x81] sm:$0xff]
        %v426 = vld [vmem:[%s362 + $0x91] sm:$0xff]
        %v427 = vld [vmem:[%s362 + $0x99] sm:$0xff]
        %v428 = vld [vmem:[%s362 + $0xa9] sm:$0xff]
        %v429 = vld [vmem:[%s362 + $0xb1] sm:$0xff]
        %v431 = vperm.slane %v352, 0
        %v433 = vmul.f32 %v414, %v431
        %v434 = vmul.f32 %v415, %v431
        %v435 = vmul.f32 %v416, %v431
        %v436 = vmul.f32 %v417, %v431
        %v437 = vmul.f32 %v418, %v431
        %v438 = vmul.f32 %v419, %v431
        %v439 = vmul.f32 %v420, %v431
        %v440 = vmul.f32 %v421, %v431
        %v441 = vmul.f32 %v422, %v431
        %v442 = vmul.f32 %v423, %v431
        %v443 = vmul.f32 %v424, %v431
        %v444 = vmul.f32 %v425, %v431
        %v445 = vmul.f32 %v426, %v431
        %v446 = vmul.f32 %v427, %v431
        %v447 = vmul.f32 %v428, %v431
        %v448 = vmul.f32 %v429, %v431
        %v449 = vadd.f32 %v398, %v433
        %v450 = vadd.f32 %v399, %v434
        %v451 = vadd.f32 %v400, %v435
        %v452 = vadd.f32 %v401, %v436
        %v453 = vadd.f32 %v402, %v437
        %v454 = vadd.f32 %v403, %v438
        %v455 = vadd.f32 %v404, %v439
        %v456 = vadd.f32 %v405, %v440
        %v457 = vadd.f32 %v406, %v441
        %v458 = vadd.f32 %v407, %v442
        %v459 = vadd.f32 %v408, %v443
        %v460 = vadd.f32 %v409, %v444
        %v461 = vadd.f32 %v410, %v445
        %v462 = vadd.f32 %v411, %v446
        %v463 = vadd.f32 %v412, %v447
        %v464 = vadd.f32 %v413, %v448
        %v465 = vld [vmem:[%s362 + $0x2] sm:$0xff]
        %v466 = vld [vmem:[%s362 + $0xa] sm:$0xff]
        %v467 = vld [vmem:[%s362 + $0x1a] sm:$0xff]
        %v468 = vld [vmem:[%s362 + $0x22] sm:$0xff]
        %v469 = vld [vmem:[%s362 + $0x32] sm:$0xff]
        %v470 = vld [vmem:[%s362 + $0x3a] sm:$0xff]
        %v471 = vld [vmem:[%s362 + $0x4a] sm:$0xff]
        %v472 = vld [vmem:[%s362 + $0x52] sm:$0xff]
        %v473 = vld [vmem:[%s362 + $0x62] sm:$0xff]
        %v474 = vld [vmem:[%s362 + $0x6a] sm:$0xff]
        %v475 = vld [vmem:[%s362 + $0x7a] sm:$0xff]
        %v476 = vld [vmem:[%s362 + $0x82] sm:$0xff]
        %v477 = vld [vmem:[%s362 + $0x92] sm:$0xff]
        %v478 = vld [vmem:[%s362 + $0x9a] sm:$0xff]
        %v479 = vld [vmem:[%s362 + $0xaa] sm:$0xff]
        %v480 = vld [vmem:[%s362 + $0xb2] sm:$0xff]
        %v482 = vperm.slane %v353, 0
        %v484 = vmul.f32 %v465, %v482
        %v485 = vmul.f32 %v466, %v482
        %v486 = vmul.f32 %v467, %v482
        %v487 = vmul.f32 %v468, %v482
        %v488 = vmul.f32 %v469, %v482
        %v489 = vmul.f32 %v470, %v482
        %v490 = vmul.f32 %v471, %v482
        %v491 = vmul.f32 %v472, %v482
        %v492 = vmul.f32 %v473, %v482
        %v493 = vmul.f32 %v474, %v482
        %v494 = vmul.f32 %v475, %v482
        %v495 = vmul.f32 %v476, %v482
        %v496 = vmul.f32 %v477, %v482
        %v497 = vmul.f32 %v478, %v482
        %v498 = vmul.f32 %v479, %v482
        %v499 = vmul.f32 %v480, %v482
        %v500 = vadd.f32 %v449, %v484
        %v501 = vadd.f32 %v450, %v485
        %v502 = vadd.f32 %v451, %v486
        %v503 = vadd.f32 %v452, %v487
        %v504 = vadd.f32 %v453, %v488
        %v505 = vadd.f32 %v454, %v489
        %v506 = vadd.f32 %v455, %v490
        %v507 = vadd.f32 %v456, %v491
        %v508 = vadd.f32 %v457, %v492
        %v509 = vadd.f32 %v458, %v493
        %v510 = vadd.f32 %v459, %v494
        %v511 = vadd.f32 %v460, %v495
        %v512 = vadd.f32 %v461, %v496
        %v513 = vadd.f32 %v462, %v497
        %v514 = vadd.f32 %v463, %v498
        %v515 = vadd.f32 %v464, %v499
        %s516 = sadd.s32 %s350, 1
        %s517 = smul.u32 %s516, 24
        %s518 = scalar_lea.vmem [#allocation2], %s517
        %v519 = vld [vmem:[%s518] sm:$0xff]
        %v520 = vld [vmem:[%s518 + $0x8] sm:$0xff]
        %v521 = vld [vmem:[%s518 + $0x18] sm:$0xff]
        %v522 = vld [vmem:[%s518 + $0x20] sm:$0xff]
        %v523 = vld [vmem:[%s518 + $0x30] sm:$0xff]
        %v524 = vld [vmem:[%s518 + $0x38] sm:$0xff]
        %v525 = vld [vmem:[%s518 + $0x48] sm:$0xff]
        %v526 = vld [vmem:[%s518 + $0x50] sm:$0xff]
        %v527 = vld [vmem:[%s518 + $0x60] sm:$0xff]
        %v528 = vld [vmem:[%s518 + $0x68] sm:$0xff]
        %v529 = vld [vmem:[%s518 + $0x78] sm:$0xff]
        %v530 = vld [vmem:[%s518 + $0x80] sm:$0xff]
        %v531 = vld [vmem:[%s518 + $0x90] sm:$0xff]
        %v532 = vld [vmem:[%s518 + $0x98] sm:$0xff]
        %v533 = vld [vmem:[%s518 + $0xa8] sm:$0xff]
        %v534 = vld [vmem:[%s518 + $0xb0] sm:$0xff]
        %v536 = vperm.slane %v354, 0
        %v538 = vmul.f32 %v519, %v536
        %v539 = vmul.f32 %v520, %v536
        %v540 = vmul.f32 %v521, %v536
        %v541 = vmul.f32 %v522, %v536
        %v542 = vmul.f32 %v523, %v536
        %v543 = vmul.f32 %v524, %v536
        %v544 = vmul.f32 %v525, %v536
        %v545 = vmul.f32 %v526, %v536
        %v546 = vmul.f32 %v527, %v536
        %v547 = vmul.f32 %v528, %v536
        %v548 = vmul.f32 %v529, %v536
        %v549 = vmul.f32 %v530, %v536
        %v550 = vmul.f32 %v531, %v536
        %v551 = vmul.f32 %v532, %v536
        %v552 = vmul.f32 %v533, %v536
        %v553 = vmul.f32 %v534, %v536
        %v554 = vadd.f32 %v500, %v538
        %v555 = vadd.f32 %v501, %v539
        %v556 = vadd.f32 %v502, %v540
        %v557 = vadd.f32 %v503, %v541
        %v558 = vadd.f32 %v504, %v542
        %v559 = vadd.f32 %v505, %v543
        %v560 = vadd.f32 %v506, %v544
        %v561 = vadd.f32 %v507, %v545
        %v562 = vadd.f32 %v508, %v546
        %v563 = vadd.f32 %v509, %v547
        %v564 = vadd.f32 %v510, %v548
        %v565 = vadd.f32 %v511, %v549
        %v566 = vadd.f32 %v512, %v550
        %v567 = vadd.f32 %v513, %v551
        %v568 = vadd.f32 %v514, %v552
        %v569 = vadd.f32 %v515, %v553
        %v570 = vld [vmem:[%s518 + $0x1] sm:$0xff]
        %v571 = vld [vmem:[%s518 + $0x9] sm:$0xff]
        %v572 = vld [vmem:[%s518 + $0x19] sm:$0xff]
        %v573 = vld [vmem:[%s518 + $0x21] sm:$0xff]
        %v574 = vld [vmem:[%s518 + $0x31] sm:$0xff]
        %v575 = vld [vmem:[%s518 + $0x39] sm:$0xff]
        %v576 = vld [vmem:[%s518 + $0x49] sm:$0xff]
        %v577 = vld [vmem:[%s518 + $0x51] sm:$0xff]
        %v578 = vld [vmem:[%s518 + $0x61] sm:$0xff]
        %v579 = vld [vmem:[%s518 + $0x69] sm:$0xff]
        %v580 = vld [vmem:[%s518 + $0x79] sm:$0xff]
        %v581 = vld [vmem:[%s518 + $0x81] sm:$0xff]
        %v582 = vld [vmem:[%s518 + $0x91] sm:$0xff]
        %v583 = vld [vmem:[%s518 + $0x99] sm:$0xff]
        %v584 = vld [vmem:[%s518 + $0xa9] sm:$0xff]
        %v585 = vld [vmem:[%s518 + $0xb1] sm:$0xff]
        %v587 = vperm.slane %v355, 0
        %v589 = vmul.f32 %v570, %v587
        %v590 = vmul.f32 %v571, %v587
        %v591 = vmul.f32 %v572, %v587
        %v592 = vmul.f32 %v573, %v587
        %v593 = vmul.f32 %v574, %v587
        %v594 = vmul.f32 %v575, %v587
        %v595 = vmul.f32 %v576, %v587
        %v596 = vmul.f32 %v577, %v587
        %v597 = vmul.f32 %v578, %v587
        %v598 = vmul.f32 %v579, %v587
        %v599 = vmul.f32 %v580, %v587
        %v600 = vmul.f32 %v581, %v587
        %v601 = vmul.f32 %v582, %v587
        %v602 = vmul.f32 %v583, %v587
        %v603 = vmul.f32 %v584, %v587
        %v604 = vmul.f32 %v585, %v587
        %v605 = vadd.f32 %v554, %v589
        %v606 = vadd.f32 %v555, %v590
        %v607 = vadd.f32 %v556, %v591
        %v608 = vadd.f32 %v557, %v592
        %v609 = vadd.f32 %v558, %v593
        %v610 = vadd.f32 %v559, %v594
        %v611 = vadd.f32 %v560, %v595
        %v612 = vadd.f32 %v561, %v596
        %v613 = vadd.f32 %v562, %v597
        %v614 = vadd.f32 %v563, %v598
        %v615 = vadd.f32 %v564, %v599
        %v616 = vadd.f32 %v565, %v600
        %v617 = vadd.f32 %v566, %v601
        %v618 = vadd.f32 %v567, %v602
        %v619 = vadd.f32 %v568, %v603
        %v620 = vadd.f32 %v569, %v604
        %v621 = vld [vmem:[%s518 + $0x2] sm:$0xff]
        %v622 = vld [vmem:[%s518 + $0xa] sm:$0xff]
        %v623 = vld [vmem:[%s518 + $0x1a] sm:$0xff]
        %v624 = vld [vmem:[%s518 + $0x22] sm:$0xff]
        %v625 = vld [vmem:[%s518 + $0x32] sm:$0xff]
        %v626 = vld [vmem:[%s518 + $0x3a] sm:$0xff]
        %v627 = vld [vmem:[%s518 + $0x4a] sm:$0xff]
        %v628 = vld [vmem:[%s518 + $0x52] sm:$0xff]
        %v629 = vld [vmem:[%s518 + $0x62] sm:$0xff]
        %v630 = vld [vmem:[%s518 + $0x6a] sm:$0xff]
        %v631 = vld [vmem:[%s518 + $0x7a] sm:$0xff]
        %v632 = vld [vmem:[%s518 + $0x82] sm:$0xff]
        %v633 = vld [vmem:[%s518 + $0x92] sm:$0xff]
        %v634 = vld [vmem:[%s518 + $0x9a] sm:$0xff]
        %v635 = vld [vmem:[%s518 + $0xaa] sm:$0xff]
        %v636 = vld [vmem:[%s518 + $0xb2] sm:$0xff]
        %v638 = vperm.slane %v356, 0
        %v640 = vmul.f32 %v621, %v638
        %v641 = vmul.f32 %v622, %v638
        %v642 = vmul.f32 %v623, %v638
        %v643 = vmul.f32 %v624, %v638
        %v644 = vmul.f32 %v625, %v638
        %v645 = vmul.f32 %v626, %v638
        %v646 = vmul.f32 %v627, %v638
        %v647 = vmul.f32 %v628, %v638
        %v648 = vmul.f32 %v629, %v638
        %v649 = vmul.f32 %v630, %v638
        %v650 = vmul.f32 %v631, %v638
        %v651 = vmul.f32 %v632, %v638
        %v652 = vmul.f32 %v633, %v638
        %v653 = vmul.f32 %v634, %v638
        %v654 = vmul.f32 %v635, %v638
        %v655 = vmul.f32 %v636, %v638
        %v656 = vadd.f32 %v605, %v640
        %v657 = vadd.f32 %v606, %v641
        %v658 = vadd.f32 %v607, %v642
        %v659 = vadd.f32 %v608, %v643
        %v660 = vadd.f32 %v609, %v644
        %v661 = vadd.f32 %v610, %v645
        %v662 = vadd.f32 %v611, %v646
        %v663 = vadd.f32 %v612, %v647
        %v664 = vadd.f32 %v613, %v648
        %v665 = vadd.f32 %v614, %v649
        %v666 = vadd.f32 %v615, %v650
        %v667 = vadd.f32 %v616, %v651
        %v668 = vadd.f32 %v617, %v652
        %v669 = vadd.f32 %v618, %v653
        %v670 = vadd.f32 %v619, %v654
        %v671 = vadd.f32 %v620, %v655
        %s672 = sadd.s32 %s350, 2
        %s673 = smul.u32 %s672, 24
        %s674 = scalar_lea.vmem [#allocation2], %s673
        %v675 = vld [vmem:[%s674] sm:$0xff]
        %v676 = vld [vmem:[%s674 + $0x8] sm:$0xff]
        %v677 = vld [vmem:[%s674 + $0x18] sm:$0xff]
        %v678 = vld [vmem:[%s674 + $0x20] sm:$0xff]
        %v679 = vld [vmem:[%s674 + $0x30] sm:$0xff]
        %v680 = vld [vmem:[%s674 + $0x38] sm:$0xff]
        %v681 = vld [vmem:[%s674 + $0x48] sm:$0xff]
        %v682 = vld [vmem:[%s674 + $0x50] sm:$0xff]
        %v683 = vld [vmem:[%s674 + $0x60] sm:$0xff]
        %v684 = vld [vmem:[%s674 + $0x68] sm:$0xff]
        %v685 = vld [vmem:[%s674 + $0x78] sm:$0xff]
        %v686 = vld [vmem:[%s674 + $0x80] sm:$0xff]
        %v687 = vld [vmem:[%s674 + $0x90] sm:$0xff]
        %v688 = vld [vmem:[%s674 + $0x98] sm:$0xff]
        %v689 = vld [vmem:[%s674 + $0xa8] sm:$0xff]
        %v690 = vld [vmem:[%s674 + $0xb0] sm:$0xff]
        %v692 = vperm.slane %v357, 0
        %v694 = vmul.f32 %v675, %v692
        %v695 = vmul.f32 %v676, %v692
        %v696 = vmul.f32 %v677, %v692
        %v697 = vmul.f32 %v678, %v692
        %v698 = vmul.f32 %v679, %v692
        %v699 = vmul.f32 %v680, %v692
        %v700 = vmul.f32 %v681, %v692
        %v701 = vmul.f32 %v682, %v692
        %v702 = vmul.f32 %v683, %v692
        %v703 = vmul.f32 %v684, %v692
        %v704 = vmul.f32 %v685, %v692
        %v705 = vmul.f32 %v686, %v692
        %v706 = vmul.f32 %v687, %v692
        %v707 = vmul.f32 %v688, %v692
        %v708 = vmul.f32 %v689, %v692
        %v709 = vmul.f32 %v690, %v692
        %v710 = vadd.f32 %v656, %v694
        %v711 = vadd.f32 %v657, %v695
        %v712 = vadd.f32 %v658, %v696
        %v713 = vadd.f32 %v659, %v697
        %v714 = vadd.f32 %v660, %v698
        %v715 = vadd.f32 %v661, %v699
        %v716 = vadd.f32 %v662, %v700
        %v717 = vadd.f32 %v663, %v701
        %v718 = vadd.f32 %v664, %v702
        %v719 = vadd.f32 %v665, %v703
        %v720 = vadd.f32 %v666, %v704
        %v721 = vadd.f32 %v667, %v705
        %v722 = vadd.f32 %v668, %v706
        %v723 = vadd.f32 %v669, %v707
        %v724 = vadd.f32 %v670, %v708
        %v725 = vadd.f32 %v671, %v709
        %v726 = vld [vmem:[%s674 + $0x1] sm:$0xff]
        %v727 = vld [vmem:[%s674 + $0x9] sm:$0xff]
        %v728 = vld [vmem:[%s674 + $0x19] sm:$0xff]
        %v729 = vld [vmem:[%s674 + $0x21] sm:$0xff]
        %v730 = vld [vmem:[%s674 + $0x31] sm:$0xff]
        %v731 = vld [vmem:[%s674 + $0x39] sm:$0xff]
        %v732 = vld [vmem:[%s674 + $0x49] sm:$0xff]
        %v733 = vld [vmem:[%s674 + $0x51] sm:$0xff]
        %v734 = vld [vmem:[%s674 + $0x61] sm:$0xff]
        %v735 = vld [vmem:[%s674 + $0x69] sm:$0xff]
        %v736 = vld [vmem:[%s674 + $0x79] sm:$0xff]
        %v737 = vld [vmem:[%s674 + $0x81] sm:$0xff]
        %v738 = vld [vmem:[%s674 + $0x91] sm:$0xff]
        %v739 = vld [vmem:[%s674 + $0x99] sm:$0xff]
        %v740 = vld [vmem:[%s674 + $0xa9] sm:$0xff]
        %v741 = vld [vmem:[%s674 + $0xb1] sm:$0xff]
        %v743 = vperm.slane %v358, 0
        %v745 = vmul.f32 %v726, %v743
        %v746 = vmul.f32 %v727, %v743
        %v747 = vmul.f32 %v728, %v743
        %v748 = vmul.f32 %v729, %v743
        %v749 = vmul.f32 %v730, %v743
        %v750 = vmul.f32 %v731, %v743
        %v751 = vmul.f32 %v732, %v743
        %v752 = vmul.f32 %v733, %v743
        %v753 = vmul.f32 %v734, %v743
        %v754 = vmul.f32 %v735, %v743
        %v755 = vmul.f32 %v736, %v743
        %v756 = vmul.f32 %v737, %v743
        %v757 = vmul.f32 %v738, %v743
        %v758 = vmul.f32 %v739, %v743
        %v759 = vmul.f32 %v740, %v743
        %v760 = vmul.f32 %v741, %v743
        %v761 = vadd.f32 %v710, %v745
        %v762 = vadd.f32 %v711, %v746
        %v763 = vadd.f32 %v712, %v747
        %v764 = vadd.f32 %v713, %v748
        %v765 = vadd.f32 %v714, %v749
        %v766 = vadd.f32 %v715, %v750
        %v767 = vadd.f32 %v716, %v751
        %v768 = vadd.f32 %v717, %v752
        %v769 = vadd.f32 %v718, %v753
        %v770 = vadd.f32 %v719, %v754
        %v771 = vadd.f32 %v720, %v755
        %v772 = vadd.f32 %v721, %v756
        %v773 = vadd.f32 %v722, %v757
        %v774 = vadd.f32 %v723, %v758
        %v775 = vadd.f32 %v724, %v759
        %v776 = vadd.f32 %v725, %v760
        %v777 = vld [vmem:[%s674 + $0x2] sm:$0xff]
        %v778 = vld [vmem:[%s674 + $0xa] sm:$0xff]
        %v779 = vld [vmem:[%s674 + $0x1a] sm:$0xff]
        %v780 = vld [vmem:[%s674 + $0x22] sm:$0xff]
        %v781 = vld [vmem:[%s674 + $0x32] sm:$0xff]
        %v782 = vld [vmem:[%s674 + $0x3a] sm:$0xff]
        %v783 = vld [vmem:[%s674 + $0x4a] sm:$0xff]
        %v784 = vld [vmem:[%s674 + $0x52] sm:$0xff]
        %v785 = vld [vmem:[%s674 + $0x62] sm:$0xff]
        %v786 = vld [vmem:[%s674 + $0x6a] sm:$0xff]
        %v787 = vld [vmem:[%s674 + $0x7a] sm:$0xff]
        %v788 = vld [vmem:[%s674 + $0x82] sm:$0xff]
        %v789 = vld [vmem:[%s674 + $0x92] sm:$0xff]
        %v790 = vld [vmem:[%s674 + $0x9a] sm:$0xff]
        %v791 = vld [vmem:[%s674 + $0xaa] sm:$0xff]
        %v792 = vld [vmem:[%s674 + $0xb2] sm:$0xff]
        %v794 = vperm.slane %v359, 0
        %v796 = vmul.f32 %v777, %v794
        %v797 = vmul.f32 %v778, %v794
        %v798 = vmul.f32 %v779, %v794
        %v799 = vmul.f32 %v780, %v794
        %v800 = vmul.f32 %v781, %v794
        %v801 = vmul.f32 %v782, %v794
        %v802 = vmul.f32 %v783, %v794
        %v803 = vmul.f32 %v784, %v794
        %v804 = vmul.f32 %v785, %v794
        %v805 = vmul.f32 %v786, %v794
        %v806 = vmul.f32 %v787, %v794
        %v807 = vmul.f32 %v788, %v794
        %v808 = vmul.f32 %v789, %v794
        %v809 = vmul.f32 %v790, %v794
        %v810 = vmul.f32 %v791, %v794
        %v811 = vmul.f32 %v792, %v794
        %v812 = vadd.f32 %v761, %v796
        %v813 = vadd.f32 %v762, %v797
        %v814 = vadd.f32 %v763, %v798
        %v815 = vadd.f32 %v764, %v799
        %v816 = vadd.f32 %v765, %v800
        %v817 = vadd.f32 %v766, %v801
        %v818 = vadd.f32 %v767, %v802
        %v819 = vadd.f32 %v768, %v803
        %v820 = vadd.f32 %v769, %v804
        %v821 = vadd.f32 %v770, %v805
        %v822 = vadd.f32 %v771, %v806
        %v823 = vadd.f32 %v772, %v807
        %v824 = vadd.f32 %v773, %v808
        %v825 = vadd.f32 %v774, %v809
        %v826 = vadd.f32 %v775, %v810
        %v827 = vadd.f32 %v776, %v811
        %v829 = vperm.slane %v360, 0
        %v831 = vadd.f32 %v812, %v829
        %v832 = vadd.f32 %v813, %v829
        %v833 = vadd.f32 %v814, %v829
        %v834 = vadd.f32 %v815, %v829
        %v835 = vadd.f32 %v816, %v829
        %v836 = vadd.f32 %v817, %v829
        %v837 = vadd.f32 %v818, %v829
        %v838 = vadd.f32 %v819, %v829
        %v839 = vadd.f32 %v820, %v829
        %v840 = vadd.f32 %v821, %v829
        %v841 = vadd.f32 %v822, %v829
        %v842 = vadd.f32 %v823, %v829
        %v843 = vadd.f32 %v824, %v829
        %v844 = vadd.f32 %v825, %v829
        %v845 = vadd.f32 %v826, %v829
        %v846 = vadd.f32 %v827, %v829
        %847 = vst [vmem:[%s221] sm:$0xff] %v831
        %848 = vst [vmem:[%s221 + $0x8] sm:$0xff] %v832
        %849 = vst [vmem:[%s221 + $0x10] sm:$0xff] %v833
        %850 = vst [vmem:[%s221 + $0x18] sm:$0xff] %v834
        %851 = vst [vmem:[%s221 + $0x20] sm:$0xff] %v835
        %852 = vst [vmem:[%s221 + $0x28] sm:$0xff] %v836
        %853 = vst [vmem:[%s221 + $0x30] sm:$0xff] %v837
        %854 = vst [vmem:[%s221 + $0x38] sm:$0xff] %v838
        %855 = vst [vmem:[%s221 + $0x40] sm:$0xff] %v839
        %856 = vst [vmem:[%s221 + $0x48] sm:$0xff] %v840
        %857 = vst [vmem:[%s221 + $0x50] sm:$0xff] %v841
        %858 = vst [vmem:[%s221 + $0x58] sm:$0xff] %v842
        %859 = vst [vmem:[%s221 + $0x60] sm:$0xff] %v843
        %860 = vst [vmem:[%s221 + $0x68] sm:$0xff] %v844
        %861 = vst [vmem:[%s221 + $0x70] sm:$0xff] %v845
        %862 = vst [vmem:[%s221 + $0x78] sm:$0xff] %v846
        %s863 = sand.u32 %s111, 1
        %s864 = scalar_lea.sflag [#allocation5], %s863
        %s865 = sand.u32 %s111, 1
        %s866 = smul.addr %s865, 128
        %s867 = scalar_lea.vmem [#allocation8], %s866
        // Predicated region
        $region45: #{tpu_custom_call.1} parent=31 // pred_check
          %p868 = pneg %p121
        $region46: #{tpu_custom_call.1} parent=31 // pred_check_branch
          %870 = sbr.rel (%p868) target = $region48
        $region47: #{tpu_custom_call.1} parent=31 // pred_region
          %s871 = smul.u32 8, %s26
          %873 = vsyncadd %s864, 0
          %s874 = smul.addr %s871, 2
          %s875 = smul.addr %s25, 32
          %s876 = sadd.s32 %s874, %s875
          %s877 = smul.addr %s876, 8
          %s878 = scalar_lea.hbm %s3, %s877
          %s879 = sshll.u32 %s867, 4
          %s880 = int_to_ptr.vmem [resolvable:$true] %s879
          %s881 = sshll.u32 %s878, 4
          %s882 = int_to_ptr.hbm [resolvable:$true] %s881
          %887 = dma.vmem_to_hbm [thread:$0]  %s880, 2048, %s882, %s864, 128, 128, 8
        $region48: #{tpu_custom_call.1} parent=31 // pred_fallthru
          _
      $region32: #{tpu_custom_call.1} parent=5 // pred_fallthru
        _
      %p888 = scmp.le.s32.totalorder 2, %s16
      // Predicated region
      $region49: #{tpu_custom_call.1} parent=5 // pred_check
        %p889 = pneg %p888
      $region50: #{tpu_custom_call.1} parent=5 // pred_check_branch
        %891 = sbr.rel (%p889) target = $region52
      $region51: #{tpu_custom_call.1} parent=5 // pred_region
        %s892 = ssub.s32 %s16, 2
        // Predicated region
        $region53: #{tpu_custom_call.1} parent=51 // pred_check
          %p893 = pneg %p127
        $region54: #{tpu_custom_call.1} parent=51 // pred_check_branch
          %895 = sbr.rel (%p893) target = $region56
        $region55: #{tpu_custom_call.1} parent=51 // pred_region
          %s896 = sand.u32 %s112, 1
          %s897 = scalar_lea.sflag [#allocation5], %s896
          %s898 = sand.u32 %s112, 1
          %s899 = smul.addr %s898, 128
          %s900 = scalar_lea.vmem [#allocation8], %s899
          %902 = dma.done %s897, 2048
        $region56: #{tpu_custom_call.1} parent=51 // pred_fallthru
          _
      $region52: #{tpu_custom_call.1} parent=5 // pred_fallthru
        _
    $region6: #{tpu_custom_call.1} parent=1 // loop_footer
      %s20 = sadd.s32 1, %s16
    $region7: #{tpu_custom_call.1} parent=1 // loop_footer_branch
      %15 = sbr.rel target = $region3
    $region8: #{tpu_custom_call.1} parent=1 // loop_exit
      _
    %903 = vsyncpa [#allocation4], 1
    %s904 = scalar_lea.sflag [#allocation4], 1
    %905 = vsyncpa %s904, 1
    %906 = vsyncpa [#allocation7], 1
    %907 = vsyncpa [#allocation5], 1
    %s908 = scalar_lea.sflag [#allocation5], 1
    %909 = vsyncpa %s908, 1

</llo_original>
